<compile_context>
chip_gen: v7x
topology: tpu7x:2x2x1
jax: 0.10.0
libtpu: 0.0.40
codegen_flags: <defaults>
</compile_context>

<pallas_src>
import jax
import jax.numpy as jnp
from jax.experimental import pallas as pl
from jax.experimental.pallas import tpu as pltpu


def _round_up(x, m):
    return ((x + m - 1) // m) * m


def fin_forward_kernel(x_ref, w1_ref, b1_ref, w2_ref, b2_ref, o_ref):
    x = x_ref[...]                                            # (bB, Dp) f32

    # F.normalize(fin, dim=1) folded into a post-matmul row scale.
    sumsq = jnp.sum(x * x, axis=1, keepdims=True)             # (bB, 1)
    inv_norm = jax.lax.rsqrt(jnp.maximum(sumsq, 1e-24))       # == 1/max(||x||, 1e-12)

    # fc1 on the MXU, then per-row scale + bias + relu on the VPU.
    h = jnp.dot(x, w1_ref[...], preferred_element_type=jnp.float32)   # (bB, H)
    h = jnp.maximum(h * inv_norm + b1_ref[...], 0.0)

    # fc2 has out_features == 1: skip the second MXU matmul, do a row-wise dot
    # against the (1, H) weight row on the VPU/XLU instead.
    y = jnp.sum(h * w2_ref[...], axis=1, keepdims=True) + b2_ref[0, 0]
    o_ref[...] = jax.nn.sigmoid(y).astype(o_ref.dtype)


def fin_forward(fin, w1, b1, w2, b2, *, block_b=256):
    """Forward pass of `Fin` (_END=True).

    fin: (B, D) f32; w1: (D, H); b1: (H,) or (1, H); w2: (H, 1); b2: scalar-like.
    Returns (B, 1) f32 = sigmoid(relu(normalize(fin, dim=1) @ w1 + b1) @ w2 + b2).
    """
    B, D = fin.shape
    H = w1.shape[1]

    # Host-side packing (done once per call; cheap and outside the kernel):
    #  - pad feature dim to a lane multiple so x / w1 tiles are (8,128)-aligned,
    #  - pad batch up to the batch tile,
    #  - pre-transpose w2 to a (1, H) row so no in-kernel XLU transpose is needed.
    Dp = _round_up(D, 128)
    bB = min(block_b, _round_up(B, 8))
    Bp = _round_up(B, bB)

    x = jnp.zeros((Bp, Dp), jnp.float32).at[:B, :D].set(fin.astype(jnp.float32))
    w1p = jnp.zeros((Dp, H), jnp.float32).at[:D, :].set(w1.astype(jnp.float32))
    b1r = jnp.asarray(b1, jnp.float32).reshape(1, H)
    w2r = jnp.asarray(w2, jnp.float32).reshape(H, 1).T                 # (1, H)
    b2r = jnp.asarray(b2, jnp.float32).reshape(1, 1)

    out = pl.pallas_call(
        fin_forward_kernel,
        out_shape=jax.ShapeDtypeStruct((Bp, 1), jnp.float32),
        grid=(Bp // bB,),
        in_specs=[
            pl.BlockSpec((bB, Dp), lambda i: (i, 0)),                  # x batch tile
            pl.BlockSpec((Dp, H), lambda i: (0, 0)),                   # w1 (resident)
            pl.BlockSpec((1, H), lambda i: (0, 0)),                    # b1 (resident)
            pl.BlockSpec((1, H), lambda i: (0, 0)),                    # w2 row (resident)
            pl.BlockSpec(memory_space=pltpu.MemorySpace.SMEM),         # b2 scalar
        ],
        out_specs=pl.BlockSpec((bB, 1), lambda i: (i, 0)),
        compiler_params=pltpu.CompilerParams(
            dimension_semantics=("parallel",)),
    )(x, w1p, b1r, w2r, b2r)
    return out[:B]


def reference_forward(fin, w1, b1, w2, b2):
    norm = jnp.sqrt(jnp.sum(fin * fin, axis=1, keepdims=True))
    xn = fin / jnp.maximum(norm, 1e-12)
    h = jnp.maximum(xn @ w1 + jnp.reshape(b1, (1, -1)), 0.0)
    return jax.nn.sigmoid(h @ jnp.reshape(w2, (-1, 1)) + jnp.reshape(b2, (1, 1)))


if __name__ == "__main__":
    # Small shapes consistent with the module: input_dim=418, hid_fin=32, batch=8.
    B, D, H = 8, 418, 32

    key = jax.random.PRNGKey(0)
    k_fin, k_w1, k_b1, k_w2, k_b2 = jax.random.split(key, 5)

    fin = jax.random.normal(k_fin, (B, D), dtype=jnp.float32)

    # Deterministic parameter init mimicking nn.Linear (uniform +/- 1/sqrt(fan_in)).
    bound1 = 1.0 / (D ** 0.5)
    w1 = jax.random.uniform(k_w1, (D, H), jnp.float32, -bound1, bound1)
    b1 = jax.random.uniform(k_b1, (1, H), jnp.float32, -bound1, bound1)
    bound2 = 1.0 / (H ** 0.5)
    w2 = jax.random.uniform(k_w2, (H, 1), jnp.float32, -bound2, bound2)
    b2 = jax.random.uniform(k_b2, (1, 1), jnp.float32, -bound2, bound2)

    out = fin_forward(fin, w1, b1, w2, b2)
    out = jax.block_until_ready(out)

    ref = reference_forward(fin, w1, b1, w2, b2)
    assert out.shape == (B, 1)
    assert jnp.allclose(out, ref, atol=1e-5, rtol=1e-5), "mismatch vs reference"

    print("KERNEL_OK")
</pallas_src>

<mosaic_0001>
module attributes {stable_mosaic.version = 11 : i64} {
  func.func @fin_forward_kernel(%arg0: i32, %arg1: memref<8x512xf32, #tpu.memory_space<vmem>>, %arg2: memref<512x32xf32, #tpu.memory_space<vmem>>, %arg3: memref<1x32xf32, #tpu.memory_space<vmem>>, %arg4: memref<1x32xf32, #tpu.memory_space<vmem>>, %arg5: memref<1x1xf32, #tpu.memory_space<smem>>, %arg6: memref<8x1xf32, #tpu.memory_space<vmem>>) attributes {dimension_semantics = [#tpu.dimension_semantics<parallel>], iteration_bounds = array<i64: 1>, scalar_prefetch = 0 : i64, scratch_operands = 0 : i64, tpu.core_type = #tpu.core_type<tc>, window_params = [{transform_indices = @transform_0, window_bounds = array<i64: 8, 512>}, {pipeline_mode = #tpu.pipeline_mode<synchronous>, transform_indices = @transform_1, window_bounds = array<i64: 512, 32>}, {pipeline_mode = #tpu.pipeline_mode<synchronous>, transform_indices = @transform_2, window_bounds = array<i64: 1, 32>}, {pipeline_mode = #tpu.pipeline_mode<synchronous>, transform_indices = @transform_3, window_bounds = array<i64: 1, 32>}, {transform_indices = @transform_4, window_bounds = array<i64: 1, 1>}, {transform_indices = @transform_5, window_bounds = array<i64: 8, 1>}]} {
    %c0 = arith.constant 0 : index
    %c0_0 = arith.constant 0 : index
    %0 = vector.load %arg1[%c0, %c0_0] : memref<8x512xf32, #tpu.memory_space<vmem>>, vector<8x512xf32>
    %1 = arith.mulf %0, %0 : vector<8x512xf32>
    %cst = arith.constant dense<0.000000e+00> : vector<8xf32>
    %2 = vector.multi_reduction <add>, %1, %cst [1] : vector<8x512xf32> to vector<8xf32>
    %3 = vector.shape_cast %2 : vector<8xf32> to vector<8x1xf32>
    %cst_1 = arith.constant 1.000000e-24 : f32
    %4 = vector.broadcast %cst_1 : f32 to vector<8x1xf32>
    %5 = arith.maximumf %3, %4 : vector<8x1xf32>
    %6 = math.rsqrt %5 : vector<8x1xf32>
    %c0_2 = arith.constant 0 : index
    %c0_3 = arith.constant 0 : index
    %7 = vector.load %arg2[%c0_2, %c0_3] : memref<512x32xf32, #tpu.memory_space<vmem>>, vector<512x32xf32>
    %cst_4 = arith.constant dense<0.000000e+00> : vector<8x32xf32>
    %8 = tpu.matmul %0, %7, %cst_4 {dimension_numbers = #tpu.dot_dimension_numbers<[1], [0], [0], [1], [0, 0, 1, 1], [], []>} : vector<8x512xf32>, vector<512x32xf32>, vector<8x32xf32> -> vector<8x32xf32>
    %9 = vector.broadcast %6 : vector<8x1xf32> to vector<8x32xf32>
    %10 = arith.mulf %8, %9 : vector<8x32xf32>
    %c0_5 = arith.constant 0 : index
    %c0_6 = arith.constant 0 : index
    %11 = vector.load %arg3[%c0_5, %c0_6] : memref<1x32xf32, #tpu.memory_space<vmem>>, vector<1x32xf32>
    %12 = vector.broadcast %11 : vector<1x32xf32> to vector<8x32xf32>
    %13 = arith.addf %10, %12 : vector<8x32xf32>
    %cst_7 = arith.constant 0.000000e+00 : f32
    %14 = vector.broadcast %cst_7 : f32 to vector<8x32xf32>
    %15 = arith.maximumf %13, %14 : vector<8x32xf32>
    %c0_8 = arith.constant 0 : index
    %c0_9 = arith.constant 0 : index
    %16 = vector.load %arg4[%c0_8, %c0_9] : memref<1x32xf32, #tpu.memory_space<vmem>>, vector<1x32xf32>
    %17 = vector.broadcast %16 : vector<1x32xf32> to vector<8x32xf32>
    %18 = arith.mulf %15, %17 : vector<8x32xf32>
    %cst_10 = arith.constant dense<0.000000e+00> : vector<8xf32>
    %19 = vector.multi_reduction <add>, %18, %cst_10 [1] : vector<8x32xf32> to vector<8xf32>
    %20 = vector.shape_cast %19 : vector<8xf32> to vector<8x1xf32>
    %c0_11 = arith.constant 0 : index
    %c0_12 = arith.constant 0 : index
    %21 = memref.load %arg5[%c0_11, %c0_12] : memref<1x1xf32, #tpu.memory_space<smem>>
    %22 = vector.broadcast %21 : f32 to vector<8x1xf32>
    %23 = arith.addf %20, %22 : vector<8x1xf32>
    %24 = arith.negf %23 : vector<8x1xf32>
    %25 = math.exp %24 : vector<8x1xf32>
    %cst_13 = arith.constant 1.000000e+00 : f32
    %26 = vector.broadcast %cst_13 : f32 to vector<8x1xf32>
    %27 = arith.addf %26, %25 : vector<8x1xf32>
    %28 = arith.divf %26, %27 : vector<8x1xf32>
    %c0_14 = arith.constant 0 : index
    %c0_15 = arith.constant 0 : index
    %29 = vector.load %arg6[%c0_14, %c0_15] : memref<8x1xf32, #tpu.memory_space<vmem>>, vector<8x1xf32>
    tpu.vector_store %arg6[%c0_14, %c0_15], %28 {strides = array<i32>} : memref<8x1xf32, #tpu.memory_space<vmem>>, vector<8x1xf32>,
    return
  }
  func.func @transform_0(%arg0: i32) -> (i32, i32) {
    %c0_i32 = arith.constant 0 : i32
    %c0_i32_0 = arith.constant 0 : i32
    return %arg0, %c0_i32 : i32, i32
  }
  func.func @transform_1(%arg0: i32) -> (i32, i32) {
    %c0_i32 = arith.constant 0 : i32
    %c0_i32_0 = arith.constant 0 : i32
    %c0_i32_1 = arith.constant 0 : i32
    return %c0_i32, %c0_i32_0 : i32, i32
  }
  func.func @transform_2(%arg0: i32) -> (i32, i32) {
    %c0_i32 = arith.constant 0 : i32
    %c0_i32_0 = arith.constant 0 : i32
    %c0_i32_1 = arith.constant 0 : i32
    return %c0_i32, %c0_i32_0 : i32, i32
  }
  func.func @transform_3(%arg0: i32) -> (i32, i32) {
    %c0_i32 = arith.constant 0 : i32
    %c0_i32_0 = arith.constant 0 : i32
    %c0_i32_1 = arith.constant 0 : i32
    return %c0_i32, %c0_i32_0 : i32, i32
  }
  func.func @transform_4(%arg0: i32) -> (i32, i32) {
    %c0_i32 = arith.constant 0 : i32
    %c0_i32_0 = arith.constant 0 : i32
    %c0_i32_1 = arith.constant 0 : i32
    return %c0_i32, %c0_i32_0 : i32, i32
  }
  func.func @transform_5(%arg0: i32) -> (i32, i32) {
    %c0_i32 = arith.constant 0 : i32
    %c0_i32_0 = arith.constant 0 : i32
    return %arg0, %c0_i32 : i32, i32
  }
}

</mosaic_0001>

<llo_original>
// kernel: tpu_custom_call.1
$region0: #{tpu_custom_call.1}
  #allocation0 [shape = 'u32[]', space=smem, size = 0x4, offset = 0x4, fixed_abs, tag = 'smem constant byte address 0x4 - core index']
  #allocation1 [shape = 'u32[144,128]{1,0:T(1,128)}', space=vmem, size = 0x12000, scoped, tag = 'internal scratch']
  #allocation2 [shape = 'f32[1,1]{1,0:T(1,128)S(6)}', space=smem, size = 0x200, scoped, tag = 'scoped memory for tpu_custom_call.1']
  %s0 = inlined_call_operand.vmem [shape: f32[8,512], index: 0, kind: input, shape index: {}]
  %s1 = inlined_call_operand.vmem [shape: f32[512,32], index: 1, kind: input, shape index: {}]
  %s2 = inlined_call_operand.vmem [shape: f32[1,32], index: 2, kind: input, shape index: {}]
  %s3 = inlined_call_operand.vmem [shape: f32[1,32], index: 3, kind: input, shape index: {}]
  %s4 = inlined_call_operand.<no memory space> [shape: f32[1,1], index: 4, kind: input, shape index: {}]
  %s5 = inlined_call_operand.vmem [shape: f32[8,1], index: 5, kind: output, shape index: {}]
  %s6 = sld [smem:[#allocation0]]
  $region30: #{tpu_custom_call.1} parent=0
    _
  %s8 = ssub.s32 1, %s6
  %s9 = scalar_select 0, %s8, %s6
  %10 = sst [smem:[#allocation2]] %s4
  // Predicated region
  $region2: #{tpu_custom_call.1} parent=0 // pred_check
    _
  $region3: #{tpu_custom_call.1} parent=0 // pred_check_branch
    %12 = sbr.rel (0) target = $region5
  $region4: #{tpu_custom_call.1} parent=0 // pred_region
    _
  $region5: #{tpu_custom_call.1} parent=0 // pred_fallthru
    _
  // Predicated region
  $region6: #{tpu_custom_call.1} parent=0 // pred_check
    _
  $region7: #{tpu_custom_call.1} parent=0 // pred_check_branch
    %14 = sbr.rel (0) target = $region9
  $region8: #{tpu_custom_call.1} parent=0 // pred_region
    _
  $region9: #{tpu_custom_call.1} parent=0 // pred_fallthru
    _
  // Predicated region
  $region10: #{tpu_custom_call.1} parent=0 // pred_check
    _
  $region11: #{tpu_custom_call.1} parent=0 // pred_check_branch
    %16 = sbr.rel (0) target = $region13
  $region12: #{tpu_custom_call.1} parent=0 // pred_region
    _
  $region13: #{tpu_custom_call.1} parent=0 // pred_fallthru
    _
  // Predicated region
  $region14: #{tpu_custom_call.1} parent=0 // pred_check
    _
  $region15: #{tpu_custom_call.1} parent=0 // pred_check_branch
    %18 = sbr.rel (0) target = $region17
  $region16: #{tpu_custom_call.1} parent=0 // pred_region
    _
  $region17: #{tpu_custom_call.1} parent=0 // pred_fallthru
    _
  // Predicated region
  $region18: #{tpu_custom_call.1} parent=0 // pred_check
    _
  $region19: #{tpu_custom_call.1} parent=0 // pred_check_branch
    %20 = sbr.rel (0) target = $region21
  $region20: #{tpu_custom_call.1} parent=0 // pred_region
    _
  $region21: #{tpu_custom_call.1} parent=0 // pred_fallthru
    _
  %v21 = vld [vmem:[%s0] sm:$0xff]
  %v22 = vld [vmem:[%s0 + $0x8] sm:$0xff]
  %v23 = vld [vmem:[%s0 + $0x10] sm:$0xff]
  %v24 = vld [vmem:[%s0 + $0x18] sm:$0xff]
  %v25 = vmul.f32 %v21, %v21
  %v26 = vmul.f32 %v22, %v22
  %v27 = vmul.f32 %v23, %v23
  %v28 = vmul.f32 %v24, %v24
  %v29 = vadd.f32 %v25, %v26
  %v30 = vadd.f32 %v29, %v27
  %v31 = vadd.f32 %v30, %v28
  %32 = vadd.xlane.f32.xlu0 %v31
  %v33 = vpop.xlane.xlu0 %32
  %v34 = vmax.f32 %v33, 1e-24
  %v35 = vrsqrt.pop %v34
  %v36 = vld [vmem:[%s1] sm:$0xff]
  %v37 = vld [vmem:[%s1 + $0x8] sm:$0xff]
  %v38 = vld [vmem:[%s1 + $0x10] sm:$0xff]
  %v39 = vld [vmem:[%s1 + $0x18] sm:$0xff]
  %v40 = vld [vmem:[%s1 + $0x20] sm:$0xff]
  %v41 = vld [vmem:[%s1 + $0x28] sm:$0xff]
  %v42 = vld [vmem:[%s1 + $0x30] sm:$0xff]
  %v43 = vld [vmem:[%s1 + $0x38] sm:$0xff]
  %v44 = vld [vmem:[%s1 + $0x40] sm:$0xff]
  %v45 = vld [vmem:[%s1 + $0x48] sm:$0xff]
  %v46 = vld [vmem:[%s1 + $0x50] sm:$0xff]
  %v47 = vld [vmem:[%s1 + $0x58] sm:$0xff]
  %v48 = vld [vmem:[%s1 + $0x60] sm:$0xff]
  %v49 = vld [vmem:[%s1 + $0x68] sm:$0xff]
  %v50 = vld [vmem:[%s1 + $0x70] sm:$0xff]
  %v51 = vld [vmem:[%s1 + $0x78] sm:$0xff]
  %v52 = vld [vmem:[%s1 + $0x80] sm:$0xff]
  %v53 = vld [vmem:[%s1 + $0x88] sm:$0xff]
  %v54 = vld [vmem:[%s1 + $0x90] sm:$0xff]
  %v55 = vld [vmem:[%s1 + $0x98] sm:$0xff]
  %v56 = vld [vmem:[%s1 + $0xa0] sm:$0xff]
  %v57 = vld [vmem:[%s1 + $0xa8] sm:$0xff]
  %v58 = vld [vmem:[%s1 + $0xb0] sm:$0xff]
  %v59 = vld [vmem:[%s1 + $0xb8] sm:$0xff]
  %v60 = vld [vmem:[%s1 + $0xc0] sm:$0xff]
  %v61 = vld [vmem:[%s1 + $0xc8] sm:$0xff]
  %v62 = vld [vmem:[%s1 + $0xd0] sm:$0xff]
  %v63 = vld [vmem:[%s1 + $0xd8] sm:$0xff]
  %v64 = vld [vmem:[%s1 + $0xe0] sm:$0xff]
  %v65 = vld [vmem:[%s1 + $0xe8] sm:$0xff]
  %v66 = vld [vmem:[%s1 + $0xf0] sm:$0xff]
  %v67 = vld [vmem:[%s1 + $0xf8] sm:$0xff]
  %v68 = vld [vmem:[%s1 + $0x100] sm:$0xff]
  %v69 = vld [vmem:[%s1 + $0x108] sm:$0xff]
  %v70 = vld [vmem:[%s1 + $0x110] sm:$0xff]
  %v71 = vld [vmem:[%s1 + $0x118] sm:$0xff]
  %v72 = vld [vmem:[%s1 + $0x120] sm:$0xff]
  %v73 = vld [vmem:[%s1 + $0x128] sm:$0xff]
  %v74 = vld [vmem:[%s1 + $0x130] sm:$0xff]
  %v75 = vld [vmem:[%s1 + $0x138] sm:$0xff]
  %v76 = vld [vmem:[%s1 + $0x140] sm:$0xff]
  %v77 = vld [vmem:[%s1 + $0x148] sm:$0xff]
  %v78 = vld [vmem:[%s1 + $0x150] sm:$0xff]
  %v79 = vld [vmem:[%s1 + $0x158] sm:$0xff]
  %v80 = vld [vmem:[%s1 + $0x160] sm:$0xff]
  %v81 = vld [vmem:[%s1 + $0x168] sm:$0xff]
  %v82 = vld [vmem:[%s1 + $0x170] sm:$0xff]
  %v83 = vld [vmem:[%s1 + $0x178] sm:$0xff]
  %v84 = vld [vmem:[%s1 + $0x180] sm:$0xff]
  %v85 = vld [vmem:[%s1 + $0x188] sm:$0xff]
  %v86 = vld [vmem:[%s1 + $0x190] sm:$0xff]
  %v87 = vld [vmem:[%s1 + $0x198] sm:$0xff]
  %v88 = vld [vmem:[%s1 + $0x1a0] sm:$0xff]
  %v89 = vld [vmem:[%s1 + $0x1a8] sm:$0xff]
  %v90 = vld [vmem:[%s1 + $0x1b0] sm:$0xff]
  %v91 = vld [vmem:[%s1 + $0x1b8] sm:$0xff]
  %v92 = vld [vmem:[%s1 + $0x1c0] sm:$0xff]
  %v93 = vld [vmem:[%s1 + $0x1c8] sm:$0xff]
  %v94 = vld [vmem:[%s1 + $0x1d0] sm:$0xff]
  %v95 = vld [vmem:[%s1 + $0x1d8] sm:$0xff]
  %v96 = vld [vmem:[%s1 + $0x1e0] sm:$0xff]
  %v97 = vld [vmem:[%s1 + $0x1e8] sm:$0xff]
  %v98 = vld [vmem:[%s1 + $0x1f0] sm:$0xff]
  %v99 = vld [vmem:[%s1 + $0x1f8] sm:$0xff]
  %100 = vmatprep.subr.mxu0 0.0
  %101 = vmatpush1.msra.mxu0 %v36
  %102 = vmatprep.subr.mxu0 0.0
  %103 = vmatpush1.msra.mxu0 %v37
  %104 = vmatprep.subr.mxu0 0.0
  %105 = vmatpush1.msra.mxu0 %v38
  %106 = vmatprep.subr.mxu0 0.0
  %107 = vmatpush1.msra.mxu0 %v39
  %108 = vmatprep.subr.mxu0 0.0
  %109 = vmatpush1.msra.mxu0 %v40
  %110 = vmatprep.subr.mxu0 0.0
  %111 = vmatpush1.msra.mxu0 %v41
  %112 = vmatprep.subr.mxu0 0.0
  %113 = vmatpush1.msra.mxu0 %v42
  %114 = vmatprep.subr.mxu0 0.0
  %115 = vmatpush1.msra.mxu0 %v43
  %116 = vmatprep.subr.mxu0 0.0
  %117 = vmatpush1.msra.mxu0 %v44
  %118 = vmatprep.subr.mxu0 0.0
  %119 = vmatpush1.msra.mxu0 %v45
  %120 = vmatprep.subr.mxu0 0.0
  %121 = vmatpush1.msra.mxu0 %v46
  %122 = vmatprep.subr.mxu0 0.0
  %123 = vmatpush1.msra.mxu0 %v47
  %124 = vmatprep.subr.mxu0 0.0
  %125 = vmatpush1.msra.mxu0 %v48
  %126 = vmatprep.subr.mxu0 0.0
  %127 = vmatpush1.msra.mxu0 %v49
  %128 = vmatprep.subr.mxu0 0.0
  %129 = vmatpush1.msra.mxu0 %v50
  %130 = vmatprep.subr.mxu0 0.0
  %131 = vmatpush1.msra.mxu0 %v51
  %132 = vmatprep.subr.mxu0 0.0
  %133 = vmatpush1.msra.mxu0 %v52
  %134 = vmatprep.subr.mxu0 0.0
  %135 = vmatpush1.msra.mxu0 %v53
  %136 = vmatprep.subr.mxu0 0.0
  %137 = vmatpush1.msra.mxu0 %v54
  %138 = vmatprep.subr.mxu0 0.0
  %139 = vmatpush1.msra.mxu0 %v55
  %140 = vmatprep.subr.mxu0 0.0
  %141 = vmatpush1.msra.mxu0 %v56
  %142 = vmatprep.subr.mxu0 0.0
  %143 = vmatpush1.msra.mxu0 %v57
  %144 = vmatprep.subr.mxu0 0.0
  %145 = vmatpush1.msra.mxu0 %v58
  %146 = vmatprep.subr.mxu0 0.0
  %147 = vmatpush1.msra.mxu0 %v59
  %148 = vmatprep.subr.mxu0 0.0
  %149 = vmatpush1.msra.mxu0 %v60
  %150 = vmatprep.subr.mxu0 0.0
  %151 = vmatpush1.msra.mxu0 %v61
  %152 = vmatprep.subr.mxu0 0.0
  %153 = vmatpush1.msra.mxu0 %v62
  %154 = vmatprep.subr.mxu0 0.0
  %155 = vmatpush1.msra.mxu0 %v63
  %156 = vmatprep.subr.mxu0 0.0
  %157 = vmatpush1.msra.mxu0 %v64
  %158 = vmatprep.subr.mxu0 0.0
  %159 = vmatpush1.msra.mxu0 %v65
  %160 = vmatprep.subr.mxu0 0.0
  %161 = vmatpush1.msra.mxu0 %v66
  %162 = vmatprep.subr.mxu0 0.0
  %163 = vmatpush1.msra.mxu0 %v67
  %164 = vmatprep.mubr.f32.mxu0 %v22
  %165 = vmatmul.mubr.f32.gmra.mrb[0].mxu0 %v21
  %v166 = vpop.f32.mrb[0].mxu0
  %v167 = vadd.f32 0.0, %v166
  %v168 = vpop.f32.mrb[0].mxu0
  %169 = vdwg.mxu0
  %170 = vmatprep.subr.mxu0 0.0
  %171 = vmatpush1.msra.mxu0 %v68
  %172 = vmatprep.subr.mxu0 0.0
  %173 = vmatpush1.msra.mxu0 %v69
  %174 = vmatprep.subr.mxu0 0.0
  %175 = vmatpush1.msra.mxu0 %v70
  %176 = vmatprep.subr.mxu0 0.0
  %177 = vmatpush1.msra.mxu0 %v71
  %178 = vmatprep.subr.mxu0 0.0
  %179 = vmatpush1.msra.mxu0 %v72
  %180 = vmatprep.subr.mxu0 0.0
  %181 = vmatpush1.msra.mxu0 %v73
  %182 = vmatprep.subr.mxu0 0.0
  %183 = vmatpush1.msra.mxu0 %v74
  %184 = vmatprep.subr.mxu0 0.0
  %185 = vmatpush1.msra.mxu0 %v75
  %186 = vmatprep.subr.mxu0 0.0
  %187 = vmatpush1.msra.mxu0 %v76
  %188 = vmatprep.subr.mxu0 0.0
  %189 = vmatpush1.msra.mxu0 %v77
  %190 = vmatprep.subr.mxu0 0.0
  %191 = vmatpush1.msra.mxu0 %v78
  %192 = vmatprep.subr.mxu0 0.0
  %193 = vmatpush1.msra.mxu0 %v79
  %194 = vmatprep.subr.mxu0 0.0
  %195 = vmatpush1.msra.mxu0 %v80
  %196 = vmatprep.subr.mxu0 0.0
  %197 = vmatpush1.msra.mxu0 %v81
  %198 = vmatprep.subr.mxu0 0.0
  %199 = vmatpush1.msra.mxu0 %v82
  %200 = vmatprep.subr.mxu0 0.0
  %201 = vmatpush1.msra.mxu0 %v83
  %202 = vmatprep.subr.mxu0 0.0
  %203 = vmatpush1.msra.mxu0 %v84
  %204 = vmatprep.subr.mxu0 0.0
  %205 = vmatpush1.msra.mxu0 %v85
  %206 = vmatprep.subr.mxu0 0.0
  %207 = vmatpush1.msra.mxu0 %v86
  %208 = vmatprep.subr.mxu0 0.0
  %209 = vmatpush1.msra.mxu0 %v87
  %210 = vmatprep.subr.mxu0 0.0
  %211 = vmatpush1.msra.mxu0 %v88
  %212 = vmatprep.subr.mxu0 0.0
  %213 = vmatpush1.msra.mxu0 %v89
  %214 = vmatprep.subr.mxu0 0.0
  %215 = vmatpush1.msra.mxu0 %v90
  %216 = vmatprep.subr.mxu0 0.0
  %217 = vmatpush1.msra.mxu0 %v91
  %218 = vmatprep.subr.mxu0 0.0
  %219 = vmatpush1.msra.mxu0 %v92
  %220 = vmatprep.subr.mxu0 0.0
  %221 = vmatpush1.msra.mxu0 %v93
  %222 = vmatprep.subr.mxu0 0.0
  %223 = vmatpush1.msra.mxu0 %v94
  %224 = vmatprep.subr.mxu0 0.0
  %225 = vmatpush1.msra.mxu0 %v95
  %226 = vmatprep.subr.mxu0 0.0
  %227 = vmatpush1.msra.mxu0 %v96
  %228 = vmatprep.subr.mxu0 0.0
  %229 = vmatpush1.msra.mxu0 %v97
  %230 = vmatprep.subr.mxu0 0.0
  %231 = vmatpush1.msra.mxu0 %v98
  %232 = vmatprep.subr.mxu0 0.0
  %233 = vmatpush1.msra.mxu0 %v99
  %234 = vmatprep.mubr.f32.mxu0 %v24
  %235 = vmatmul.mubr.f32.gmra.mrb[0].mxu0 %v23
  %v236 = vpop.f32.mrb[0].mxu0
  %v237 = vadd.f32 %v167, %v236
  %v238 = vpop.f32.mrb[0].mxu0
  %239 = vdwg.mxu0
  %v240 = vmul.f32 %v237, %v35
  %v241 = vld [vmem:[%s2] sm:$0x1]
  %v243 = vlaneseq
  %v244 = vshrl.u32 %v243, 7
  %v245 = vsub.s32 0, %v244
  %v246 = vrot.slane %v241, %v245
  %v248 = vadd.f32 %v240, %v246
  %v249 = vmax.f32 %v248, 0.0
  %v250 = vld [vmem:[%s3] sm:$0x1]
  %v252 = vlaneseq
  %v253 = vshrl.u32 %v252, 7
  %v254 = vsub.s32 0, %v253
  %v255 = vrot.slane %v250, %v254
  %v257 = vmul.f32 %v249, %v255
  %vm258 = vcmask 261120
  %v259 = vsel %vm258, %v257, 0.0
  %260 = vadd.xlane.f32.xlu0 %v259
  %v261 = vpop.xlane.xlu0 %260
  %s262 = sld [smem:[#allocation2]]
  %v263 = vstv %s262
  %v264 = vadd.f32 %v261, %v263
  %v265 = vxor.u32 %v264, 2147483648
  %v266 = vmul.f32 %v265, 1.442695
  %v267 = vpow.pop %v266
  %v268 = vadd.f32 %v267, 1.0
  %v269 = vrcp.pop %v268
  %v270 = vmul.f32 1.0, %v269
  %vm271 = vcmask 7168
  %272 = vst.msk [vmem:[%s5] sm:$0xff] %vm271, %v270
  // Predicated region
  $region22: #{tpu_custom_call.1} parent=0 // pred_check
    _
  $region23: #{tpu_custom_call.1} parent=0 // pred_check_branch
    %274 = sbr.rel (0) target = $region25
  $region24: #{tpu_custom_call.1} parent=0 // pred_region
    _
  $region25: #{tpu_custom_call.1} parent=0 // pred_fallthru
    _
  // Predicated region
  $region26: #{tpu_custom_call.1} parent=0 // pred_check
    _
  $region27: #{tpu_custom_call.1} parent=0 // pred_check_branch
    %276 = sbr.rel (0) target = $region29
  $region28: #{tpu_custom_call.1} parent=0 // pred_region
    _
  $region29: #{tpu_custom_call.1} parent=0 // pred_fallthru
    _

</llo_original>
